<compile_context>
chip_gen: v7x
topology: tpu7x:2x2x1
jax: 0.10.0
libtpu: 0.0.40
codegen_flags: <defaults>
</compile_context>

<pallas_src>
import math
import functools

import jax
import jax.numpy as jnp
from jax.experimental import pallas as pl
from jax.experimental.pallas import tpu as pltpu

SHIFT_ZERO = 1.0 / math.sqrt(2.0 * math.pi)  # fixed std of FullyConnectedFixedStdNormal


def _round_up(x, m):
    return (x + m - 1) // m * m


@functools.lru_cache(maxsize=1)
def _chip_config():
    """Generation-aware tiling policy (VMEM budget/limit, max batch tile, #TCs)."""
    kind = ""
    try:
        kind = jax.devices()[0].device_kind.lower()
    except Exception:  # defensive: fall through to conservative defaults
        pass
    if "v7" in kind:      # 64 MiB VMEM / TC, 2 TensorCores, 256x256 MXU
        return {"vmem_budget": 40 << 20, "vmem_limit": 48 << 20,
                "block_cap": 512, "num_tc": 2, "mxu_m": 256}
    if "v6" in kind:      # 128 MiB VMEM, 1 TC, 256x256 MXU
        return {"vmem_budget": 80 << 20, "vmem_limit": 100 << 20,
                "block_cap": 1024, "num_tc": 1, "mxu_m": 256}
    if "v5" in kind:      # 128 MiB VMEM, 1 TC, 128x128 MXU
        return {"vmem_budget": 80 << 20, "vmem_limit": 100 << 20,
                "block_cap": 1024, "num_tc": 1, "mxu_m": 128}
    # Unknown generation: conservative (v7x-safe) settings.
    return {"vmem_budget": 40 << 20, "vmem_limit": 48 << 20,
            "block_cap": 512, "num_tc": 1, "mxu_m": 128}


def _mlp_kernel(eo_ref, neo_ref, w1a_ref, w1b_ref, b1_ref,
                w2_ref, b2_ref, w3_ref, b3_ref, mean_ref):
    # fc_in on concat([eo, neo], -1) == eo @ W1[:E] + neo @ W1[E:] + b1
    # Matmul operands are cast in-register to the (cached) weight dtype; f32 MXU
    # accumulation; bias/ReLU stay f32 (v5e VPU has no bf16).
    # NOTE: default matmul precision; pass precision=lax.Precision.HIGHEST to the
    # dots if bit-level parity with torch fp32 matmuls is required.
    mm = w1a_ref.dtype
    h = (jnp.dot(eo_ref[...].astype(mm), w1a_ref[...],
                 preferred_element_type=jnp.float32)
         + jnp.dot(neo_ref[...].astype(mm), w1b_ref[...],
                   preferred_element_type=jnp.float32)
         + b1_ref[...])
    h = jnp.maximum(h, 0.0)
    h = jnp.dot(h.astype(mm), w2_ref[...],
                preferred_element_type=jnp.float32) + b2_ref[...]
    h = jnp.maximum(h, 0.0)
    out = jnp.dot(h.astype(mm), w3_ref[...],
                  preferred_element_type=jnp.float32) + b3_ref[...]
    mean_ref[...] = out.astype(mean_ref.dtype)


def _choose_block_b(B, E, H, A_pad, in_bytes, weight_bytes, cfg):
    """Largest MXU-friendly batch tile that fits the per-generation VMEM budget.

    The batch is only split into multiple grid steps on chips with >= 2
    TensorCores (v7x megacore); single-TC chips take the largest tile that fits.
    """
    avail = max(cfg["vmem_budget"] - weight_bytes, 1 << 20)
    # Per batch-row VMEM: double-buffered activation inputs (eo + neo),
    # double-buffered mean output, plus f32 intermediates headroom.
    per_row = 2 * 2 * E * in_bytes + 2 * A_pad * 4 + 4 * H * 4
    cap_rows = max(8, avail // per_row)
    block = cfg["block_cap"]
    while block > 8 and block > cap_rows:
        block //= 2
    block = min(block, _round_up(B, 8))
    # MXU M-granularity rounding for large tiles (256 on v6e/v7x, 128 on v5e).
    if block >= cfg["mxu_m"]:
        block = (block // cfg["mxu_m"]) * cfg["mxu_m"]
    # Megacore: keep >= 2 grid steps only when the chip actually has 2 TCs.
    if cfg["num_tc"] >= 2:
        while B > 8 and block >= B and block > 8:
            block //= 2
    return max(8, block)


def prepare_params(params, matmul_dtype=jnp.float32):
    """One-time weight preparation — call once, cache the result, reuse per step.

    * fc_in weight is split into its two concat halves (feature-axis concat
      becomes two matmuls; exactly equivalent, no per-call concat/copy pass).
    * Matmul weights are cast to `matmul_dtype` once (bf16 halves weight DMA and
      roughly doubles MXU throughput on v5e/v6e/v7x; accumulation stays f32).
    * fc_out weight/bias are zero-padded to a multiple of 128 lanes so the output
      store is lane-dense (unmasked vst); padded columns are exact zeros.
    """
    mm_dtype = jnp.dtype(matmul_dtype)
    w1, b1 = params["w1"], params["b1"]   # (2E, H), (H,)
    w2, b2 = params["w2"], params["b2"]   # (H, H),  (H,)
    w3, b3 = params["w3"], params["b3"]   # (H, A),  (A,)
    two_e, H = w1.shape
    E = two_e // 2
    A = w3.shape[1]
    A_pad = _round_up(A, 128)
    return {
        "w1a": jnp.asarray(w1[:E, :], mm_dtype),
        "w1b": jnp.asarray(w1[E:, :], mm_dtype),
        "b1": jnp.asarray(b1, jnp.float32).reshape(1, H),
        "w2": jnp.asarray(w2, mm_dtype),
        "b2": jnp.asarray(b2, jnp.float32).reshape(1, H),
        "w3": jnp.pad(jnp.asarray(w3, mm_dtype), ((0, 0), (0, A_pad - A))),
        "b3": jnp.pad(jnp.asarray(b3, jnp.float32), (0, A_pad - A)).reshape(1, A_pad),
        "dim_action": int(A),
    }


@functools.partial(jax.jit, static_argnames=("dim_action", "block_b"))
def _forward(embed_obs, next_embed_obs, arrays, dim_action, block_b):
    B, E = embed_obs.shape
    w1a, w1b, b1 = arrays["w1a"], arrays["w1b"], arrays["b1"]
    w2, b2 = arrays["w2"], arrays["b2"]
    w3, b3 = arrays["w3"], arrays["b3"]
    H = w1a.shape[1]
    A_pad = w3.shape[1]
    out_dtype = embed_obs.dtype
    in_bytes = jnp.dtype(embed_obs.dtype).itemsize
    mm_bytes = jnp.dtype(w1a.dtype).itemsize

    cfg = _chip_config()
    weight_bytes = (2 * E * H + H * H + H * A_pad) * mm_bytes + (2 * H + A_pad) * 4
    if weight_bytes > cfg["vmem_budget"]:
        # TODO(synk): add an N/K weight-tiling grid axis with an f32 accumulator to
        # lift this whole-weight-residency ceiling (hit ~2x earlier on v7x 64 MiB).
        raise ValueError(
            f"resident weights ({weight_bytes} B) exceed the VMEM tile budget "
            f"({cfg['vmem_budget']} B); use matmul_dtype=bfloat16 or add weight tiling")

    if block_b is None:
        block_b = _choose_block_b(B, E, H, A_pad, in_bytes, weight_bytes, cfg)

    grid = (pl.cdiv(B, block_b),)

    batch_spec = lambda shape: pl.BlockSpec(shape, lambda i: (i, 0))
    # Grid-invariant operands: a single resident VMEM copy (no double buffering).
    const_spec = lambda shape: pl.BlockSpec(shape, lambda i: (0, 0),
                                            pipeline_mode=pl.Buffered(1))

    flops = 2 * B * (2 * E * H + H * H + H * A_pad)
    bytes_accessed = (B * 2 * E * in_bytes + weight_bytes
                      + B * A_pad * jnp.dtype(out_dtype).itemsize)
    cost = pl.CostEstimate(flops=flops, transcendentals=0,
                           bytes_accessed=bytes_accessed)

    mean_p = pl.pallas_call(
        _mlp_kernel,
        out_shape=jax.ShapeDtypeStruct((B, A_pad), out_dtype),
        grid_spec=pltpu.PrefetchScalarGridSpec(
            num_scalar_prefetch=0,
            grid=grid,
            in_specs=[
                batch_spec((block_b, E)),    # embed_obs tile (original dtype)
                batch_spec((block_b, E)),    # next_embed_obs tile
                const_spec((E, H)),          # W1 (first concat half)
                const_spec((E, H)),          # W1 (second concat half)
                const_spec((1, H)),          # b1
                const_spec((H, H)),          # W2
                const_spec((1, H)),          # b2
                const_spec((H, A_pad)),      # W3 (lane-padded)
                const_spec((1, A_pad)),      # b3 (lane-padded)
            ],
            out_specs=batch_spec((block_b, A_pad)),
        ),
        compiler_params=pltpu.CompilerParams(
            dimension_semantics=("parallel",),
            vmem_limit_bytes=cfg["vmem_limit"]),
        cost_estimate=cost,
    )(embed_obs, next_embed_obs, w1a, w1b, b1, w2, b2, w3, b3)

    # Slice off the lane padding (exact: padded weight/bias columns are zero).
    # Consumers that tolerate a padded trailing dim can read mean_p directly.
    return mean_p[:, :dim_action]


def continuous_action_predictor(embed_obs, next_embed_obs, params, block_b=None):
    """Returns (mean, std) of the DeterministicNormal output distribution.

    `params` should be the cached result of prepare_params(); raw (un-prepared)
    parameter dicts are accepted but re-prepared on every call.
    """
    if "w1a" not in params:
        params = prepare_params(params)
    arrays = dict(params)
    dim_action = arrays.pop("dim_action")
    mean = _forward(embed_obs, next_embed_obs, arrays, dim_action, block_b)
    # Fixed std is a pure constant: build it in the wrapper instead of burning
    # kernel output DMA / VMEM on it.
    std = jnp.full(mean.shape, SHIFT_ZERO, mean.dtype)
    return mean, std


def init_params(key, dim_embed, dim_action, dim_hidden=None):
    """Deterministic synthetic parameters matching the module's shapes.

    nn.Linear(in, out) has weight (out, in); we store the transpose (in, out).
    """
    if dim_hidden is None:
        dim_hidden = dim_embed
    k1, k2, k3, k4, k5, k6 = jax.random.split(key, 6)
    scale = 0.1
    return {
        "w1": scale * jax.random.normal(k1, (dim_embed * 2, dim_hidden), jnp.float32),
        "b1": scale * jax.random.normal(k2, (dim_hidden,), jnp.float32),
        "w2": scale * jax.random.normal(k3, (dim_hidden, dim_hidden), jnp.float32),
        "b2": scale * jax.random.normal(k4, (dim_hidden,), jnp.float32),
        "w3": scale * jax.random.normal(k5, (dim_hidden, dim_action), jnp.float32),
        "b3": scale * jax.random.normal(k6, (dim_action,), jnp.float32),
    }


def _reference(embed_obs, next_embed_obs, params):
    x = jnp.concatenate([embed_obs, next_embed_obs], axis=-1)
    h = jax.nn.relu(x @ params["w1"] + params["b1"])
    h = jax.nn.relu(h @ params["w2"] + params["b2"])
    mean = h @ params["w3"] + params["b3"]
    std = jnp.full_like(mean, SHIFT_ZERO)
    return mean, std


if __name__ == "__main__":
    # Small shapes consistent with the module; A=8 exercises the lane-padding
    # path (A_pad=128). block_b auto-selects (e.g. full batch on v5e/v6e, split
    # only on v7x megacore).
    B, E, H, A = 32, 16, 32, 8
    key = jax.random.PRNGKey(0)
    kp, ko, kn = jax.random.split(key, 3)

    params = init_params(kp, dim_embed=E, dim_action=A, dim_hidden=H)
    embed_obs = jax.random.normal(ko, (B, E), jnp.float32)
    next_embed_obs = jax.random.normal(kn, (B, E), jnp.float32)

    ref_mean, ref_std = _reference(embed_obs, next_embed_obs, params)

    # f32 matmul path. prepare_params is called ONCE and reused across calls.
    prep_f32 = prepare_params(params, matmul_dtype=jnp.float32)
    mean, std = continuous_action_predictor(embed_obs, next_embed_obs, prep_f32)
    jax.block_until_ready((mean, std))
    assert mean.shape == (B, A) and std.shape == (B, A)
    assert jnp.allclose(mean, ref_mean, atol=1e-4, rtol=1e-4)
    assert jnp.allclose(std, ref_std)

    # bf16 matmul path (fast on v5e/v6e/v7x MXU): f32 accumulation, looser tol.
    prep_bf16 = prepare_params(params, matmul_dtype=jnp.bfloat16)
    mean_bf, std_bf = continuous_action_predictor(embed_obs, next_embed_obs, prep_bf16)
    jax.block_until_ready((mean_bf, std_bf))
    assert mean_bf.shape == (B, A) and std_bf.shape == (B, A)
    assert jnp.allclose(mean_bf, ref_mean, atol=5e-2, rtol=5e-2)
    assert jnp.allclose(std_bf, ref_std)

    print("KERNEL_OK")
</pallas_src>

<mosaic_0001>
module attributes {stable_mosaic.version = 11 : i64} {
  func.func @_mlp_kernel(%arg0: i32, %arg1: memref<32x16xf32, #tpu.memory_space<vmem>>, %arg2: memref<32x16xf32, #tpu.memory_space<vmem>>, %arg3: memref<16x32xf32, #tpu.memory_space<vmem>>, %arg4: memref<16x32xf32, #tpu.memory_space<vmem>>, %arg5: memref<1x32xf32, #tpu.memory_space<vmem>>, %arg6: memref<32x32xf32, #tpu.memory_space<vmem>>, %arg7: memref<1x32xf32, #tpu.memory_space<vmem>>, %arg8: memref<32x128xf32, #tpu.memory_space<vmem>>, %arg9: memref<1x128xf32, #tpu.memory_space<vmem>>, %arg10: memref<32x128xf32, #tpu.memory_space<vmem>>) attributes {dimension_semantics = [#tpu.dimension_semantics<parallel>], iteration_bounds = array<i64: 1>, scalar_prefetch = 0 : i64, scratch_operands = 0 : i64, tpu.core_type = #tpu.core_type<tc>, window_params = [{transform_indices = @transform_0, window_bounds = array<i64: 32, 16>}, {transform_indices = @transform_1, window_bounds = array<i64: 32, 16>}, {pipeline_mode = #tpu.pipeline_mode<synchronous>, transform_indices = @transform_2, window_bounds = array<i64: 16, 32>}, {pipeline_mode = #tpu.pipeline_mode<synchronous>, transform_indices = @transform_3, window_bounds = array<i64: 16, 32>}, {pipeline_mode = #tpu.pipeline_mode<synchronous>, transform_indices = @transform_4, window_bounds = array<i64: 1, 32>}, {pipeline_mode = #tpu.pipeline_mode<synchronous>, transform_indices = @transform_5, window_bounds = array<i64: 32, 32>}, {pipeline_mode = #tpu.pipeline_mode<synchronous>, transform_indices = @transform_6, window_bounds = array<i64: 1, 32>}, {pipeline_mode = #tpu.pipeline_mode<synchronous>, transform_indices = @transform_7, window_bounds = array<i64: 32, 128>}, {pipeline_mode = #tpu.pipeline_mode<synchronous>, transform_indices = @transform_8, window_bounds = array<i64: 1, 128>}, {transform_indices = @transform_9, window_bounds = array<i64: 32, 128>}]} {
    %c0 = arith.constant 0 : index
    %c0_0 = arith.constant 0 : index
    %0 = vector.load %arg1[%c0, %c0_0] : memref<32x16xf32, #tpu.memory_space<vmem>>, vector<32x16xf32>
    %c0_1 = arith.constant 0 : index
    %c0_2 = arith.constant 0 : index
    %1 = vector.load %arg3[%c0_1, %c0_2] : memref<16x32xf32, #tpu.memory_space<vmem>>, vector<16x32xf32>
    %cst = arith.constant dense<0.000000e+00> : vector<32x32xf32>
    %2 = tpu.matmul %0, %1, %cst {dimension_numbers = #tpu.dot_dimension_numbers<[1], [0], [0], [1], [0, 0, 1, 1], [], []>} : vector<32x16xf32>, vector<16x32xf32>, vector<32x32xf32> -> vector<32x32xf32>
    %c0_3 = arith.constant 0 : index
    %c0_4 = arith.constant 0 : index
    %3 = vector.load %arg2[%c0_3, %c0_4] : memref<32x16xf32, #tpu.memory_space<vmem>>, vector<32x16xf32>
    %c0_5 = arith.constant 0 : index
    %c0_6 = arith.constant 0 : index
    %4 = vector.load %arg4[%c0_5, %c0_6] : memref<16x32xf32, #tpu.memory_space<vmem>>, vector<16x32xf32>
    %cst_7 = arith.constant dense<0.000000e+00> : vector<32x32xf32>
    %5 = tpu.matmul %3, %4, %cst_7 {dimension_numbers = #tpu.dot_dimension_numbers<[1], [0], [0], [1], [0, 0, 1, 1], [], []>} : vector<32x16xf32>, vector<16x32xf32>, vector<32x32xf32> -> vector<32x32xf32>
    %6 = arith.addf %2, %5 : vector<32x32xf32>
    %c0_8 = arith.constant 0 : index
    %c0_9 = arith.constant 0 : index
    %7 = vector.load %arg5[%c0_8, %c0_9] : memref<1x32xf32, #tpu.memory_space<vmem>>, vector<1x32xf32>
    %8 = vector.broadcast %7 : vector<1x32xf32> to vector<32x32xf32>
    %9 = arith.addf %6, %8 : vector<32x32xf32>
    %cst_10 = arith.constant 0.000000e+00 : f32
    %10 = vector.broadcast %cst_10 : f32 to vector<32x32xf32>
    %11 = arith.maximumf %9, %10 : vector<32x32xf32>
    %c0_11 = arith.constant 0 : index
    %c0_12 = arith.constant 0 : index
    %12 = vector.load %arg6[%c0_11, %c0_12] : memref<32x32xf32, #tpu.memory_space<vmem>>, vector<32x32xf32>
    %cst_13 = arith.constant dense<0.000000e+00> : vector<32x32xf32>
    %13 = tpu.matmul %11, %12, %cst_13 {dimension_numbers = #tpu.dot_dimension_numbers<[1], [0], [0], [1], [0, 0, 1, 1], [], []>} : vector<32x32xf32>, vector<32x32xf32>, vector<32x32xf32> -> vector<32x32xf32>
    %c0_14 = arith.constant 0 : index
    %c0_15 = arith.constant 0 : index
    %14 = vector.load %arg7[%c0_14, %c0_15] : memref<1x32xf32, #tpu.memory_space<vmem>>, vector<1x32xf32>
    %15 = vector.broadcast %14 : vector<1x32xf32> to vector<32x32xf32>
    %16 = arith.addf %13, %15 : vector<32x32xf32>
    %cst_16 = arith.constant 0.000000e+00 : f32
    %17 = vector.broadcast %cst_16 : f32 to vector<32x32xf32>
    %18 = arith.maximumf %16, %17 : vector<32x32xf32>
    %c0_17 = arith.constant 0 : index
    %c0_18 = arith.constant 0 : index
    %19 = vector.load %arg8[%c0_17, %c0_18] : memref<32x128xf32, #tpu.memory_space<vmem>>, vector<32x128xf32>
    %cst_19 = arith.constant dense<0.000000e+00> : vector<32x128xf32>
    %20 = tpu.matmul %18, %19, %cst_19 {dimension_numbers = #tpu.dot_dimension_numbers<[1], [0], [0], [1], [0, 0, 1, 1], [], []>} : vector<32x32xf32>, vector<32x128xf32>, vector<32x128xf32> -> vector<32x128xf32>
    %c0_20 = arith.constant 0 : index
    %c0_21 = arith.constant 0 : index
    %21 = vector.load %arg9[%c0_20, %c0_21] : memref<1x128xf32, #tpu.memory_space<vmem>>, vector<1x128xf32>
    %22 = vector.broadcast %21 : vector<1x128xf32> to vector<32x128xf32>
    %23 = arith.addf %20, %22 : vector<32x128xf32>
    %c0_22 = arith.constant 0 : index
    %c0_23 = arith.constant 0 : index
    %24 = vector.load %arg10[%c0_22, %c0_23] : memref<32x128xf32, #tpu.memory_space<vmem>>, vector<32x128xf32>
    tpu.vector_store %arg10[%c0_22, %c0_23], %23 {strides = array<i32>} : memref<32x128xf32, #tpu.memory_space<vmem>>, vector<32x128xf32>,
    return
  }
  func.func @transform_0(%arg0: i32) -> (i32, i32) {
    %c0_i32 = arith.constant 0 : i32
    %c0_i32_0 = arith.constant 0 : i32
    return %arg0, %c0_i32 : i32, i32
  }
  func.func @transform_1(%arg0: i32) -> (i32, i32) {
    %c0_i32 = arith.constant 0 : i32
    %c0_i32_0 = arith.constant 0 : i32
    return %arg0, %c0_i32 : i32, i32
  }
  func.func @transform_2(%arg0: i32) -> (i32, i32) {
    %c0_i32 = arith.constant 0 : i32
    %c0_i32_0 = arith.constant 0 : i32
    %c0_i32_1 = arith.constant 0 : i32
    return %c0_i32, %c0_i32_0 : i32, i32
  }
  func.func @transform_3(%arg0: i32) -> (i32, i32) {
    %c0_i32 = arith.constant 0 : i32
    %c0_i32_0 = arith.constant 0 : i32
    %c0_i32_1 = arith.constant 0 : i32
    return %c0_i32, %c0_i32_0 : i32, i32
  }
  func.func @transform_4(%arg0: i32) -> (i32, i32) {
    %c0_i32 = arith.constant 0 : i32
    %c0_i32_0 = arith.constant 0 : i32
    %c0_i32_1 = arith.constant 0 : i32
    return %c0_i32, %c0_i32_0 : i32, i32
  }
  func.func @transform_5(%arg0: i32) -> (i32, i32) {
    %c0_i32 = arith.constant 0 : i32
    %c0_i32_0 = arith.constant 0 : i32
    %c0_i32_1 = arith.constant 0 : i32
    return %c0_i32, %c0_i32_0 : i32, i32
  }
  func.func @transform_6(%arg0: i32) -> (i32, i32) {
    %c0_i32 = arith.constant 0 : i32
    %c0_i32_0 = arith.constant 0 : i32
    %c0_i32_1 = arith.constant 0 : i32
    return %c0_i32, %c0_i32_0 : i32, i32
  }
  func.func @transform_7(%arg0: i32) -> (i32, i32) {
    %c0_i32 = arith.constant 0 : i32
    %c0_i32_0 = arith.constant 0 : i32
    %c0_i32_1 = arith.constant 0 : i32
    return %c0_i32, %c0_i32_0 : i32, i32
  }
  func.func @transform_8(%arg0: i32) -> (i32, i32) {
    %c0_i32 = arith.constant 0 : i32
    %c0_i32_0 = arith.constant 0 : i32
    %c0_i32_1 = arith.constant 0 : i32
    return %c0_i32, %c0_i32_0 : i32, i32
  }
  func.func @transform_9(%arg0: i32) -> (i32, i32) {
    %c0_i32 = arith.constant 0 : i32
    %c0_i32_0 = arith.constant 0 : i32
    return %arg0, %c0_i32 : i32, i32
  }
}

</mosaic_0001>

<llo_original>
// kernel: _forward.1
$region0: #{_forward.1}
  #allocation0 [shape = 'u32[]', space=smem, size = 0x4, offset = 0x4, fixed_abs, tag = 'smem constant byte address 0x4 - core index']
  #allocation1 [shape = 'u32[144,128]{1,0:T(1,128)}', space=vmem, size = 0x12000, scoped, tag = 'internal scratch']
  %s0 = inlined_call_operand.vmem [shape: f32[32,16], index: 0, kind: input, shape index: {}]
  %s1 = inlined_call_operand.vmem [shape: f32[32,16], index: 1, kind: input, shape index: {}]
  %s2 = inlined_call_operand.vmem [shape: f32[16,32], index: 2, kind: input, shape index: {}]
  %s3 = inlined_call_operand.vmem [shape: f32[16,32], index: 3, kind: input, shape index: {}]
  %s4 = inlined_call_operand.vmem [shape: f32[1,32], index: 4, kind: input, shape index: {}]
  %s5 = inlined_call_operand.vmem [shape: f32[32,32], index: 5, kind: input, shape index: {}]
  %s6 = inlined_call_operand.vmem [shape: f32[1,32], index: 6, kind: input, shape index: {}]
  %s7 = inlined_call_operand.vmem [shape: f32[32,128], index: 7, kind: input, shape index: {}]
  %s8 = inlined_call_operand.hbm [shape: f32[1,128], index: 8, kind: input, shape index: {}]
  %s9 = inlined_call_operand.vmem [shape: f32[32,128], index: 9, kind: output, shape index: {}]
  %s10 = sld [smem:[#allocation0]]
  $region50: #{_forward.1} parent=0
    _
  %s12 = ssub.s32 1, %s10
  %s13 = scalar_select 0, %s12, %s10
  $region1: #{_forward.1} parent=0
    #allocation2 [shape = 'u8[512]{0}', space=vmem, size = 0x400, scoped, tag = 'input window, operand 8, single buffered']
    #allocation3 [shape = 's32[1]{0}', space=sflag, size = 0x4, scoped, tag = 'scoped memory for _forward.1']
    %14 = vsyncpa [#allocation3], 0
    // Predicated region
    $region2: #{_forward.1} parent=1 // pred_check
      _
    $region3: #{_forward.1} parent=1 // pred_check_branch
      %16 = sbr.rel (0) target = $region5
    $region4: #{_forward.1} parent=1 // pred_region
      _
    $region5: #{_forward.1} parent=1 // pred_fallthru
      _
    // Predicated region
    $region6: #{_forward.1} parent=1 // pred_check
      _
    $region7: #{_forward.1} parent=1 // pred_check_branch
      %18 = sbr.rel (0) target = $region9
    $region8: #{_forward.1} parent=1 // pred_region
      _
    $region9: #{_forward.1} parent=1 // pred_fallthru
      _
    // Predicated region
    $region10: #{_forward.1} parent=1 // pred_check
      _
    $region11: #{_forward.1} parent=1 // pred_check_branch
      %20 = sbr.rel (0) target = $region13
    $region12: #{_forward.1} parent=1 // pred_region
      _
    $region13: #{_forward.1} parent=1 // pred_fallthru
      _
    // Predicated region
    $region14: #{_forward.1} parent=1 // pred_check
      _
    $region15: #{_forward.1} parent=1 // pred_check_branch
      %22 = sbr.rel (0) target = $region17
    $region16: #{_forward.1} parent=1 // pred_region
      _
    $region17: #{_forward.1} parent=1 // pred_fallthru
      _
    // Predicated region
    $region18: #{_forward.1} parent=1 // pred_check
      _
    $region19: #{_forward.1} parent=1 // pred_check_branch
      %24 = sbr.rel (0) target = $region21
    $region20: #{_forward.1} parent=1 // pred_region
      _
    $region21: #{_forward.1} parent=1 // pred_fallthru
      _
    // Predicated region
    $region22: #{_forward.1} parent=1 // pred_check
      _
    $region23: #{_forward.1} parent=1 // pred_check_branch
      %26 = sbr.rel (0) target = $region25
    $region24: #{_forward.1} parent=1 // pred_region
      _
    $region25: #{_forward.1} parent=1 // pred_fallthru
      _
    // Predicated region
    $region26: #{_forward.1} parent=1 // pred_check
      _
    $region27: #{_forward.1} parent=1 // pred_check_branch
      %28 = sbr.rel (0) target = $region29
    $region28: #{_forward.1} parent=1 // pred_region
      _
    $region29: #{_forward.1} parent=1 // pred_fallthru
      _
    // Predicated region
    $region30: #{_forward.1} parent=1 // pred_check
      _
    $region31: #{_forward.1} parent=1 // pred_check_branch
      %30 = sbr.rel (0) target = $region33
    $region32: #{_forward.1} parent=1 // pred_region
      _
    $region33: #{_forward.1} parent=1 // pred_fallthru
      _
    // Predicated region
    $region34: #{_forward.1} parent=1 // pred_check
      _
    $region35: #{_forward.1} parent=1 // pred_check_branch
      %32 = sbr.rel (0) target = $region37
    $region36: #{_forward.1} parent=1 // pred_region
      %s34 = ssub.s32 16, 16
      %35 = vsyncadd [#allocation3], %s34
      %s37 = sshll.u32 [#allocation2], 4
      %s38 = int_to_ptr.vmem [resolvable:$true] %s37
      %40 = dma.hbm_to_vmem [thread:$0]  %s8, 16, %s38, [#allocation3]
    $region37: #{_forward.1} parent=1 // pred_fallthru
      _
    // Predicated region
    $region38: #{_forward.1} parent=1 // pred_check
      _
    $region39: #{_forward.1} parent=1 // pred_check_branch
      %42 = sbr.rel (0) target = $region41
    $region40: #{_forward.1} parent=1 // pred_region
      %43 = dma.done [#allocation3], 16
    $region41: #{_forward.1} parent=1 // pred_fallthru
      _
    %v44 = vld [vmem:[%s0] sm:$0xff]
    %v45 = vld [vmem:[%s0 + $0x8] sm:$0xff]
    %v46 = vld [vmem:[%s0 + $0x10] sm:$0xff]
    %v47 = vld [vmem:[%s0 + $0x18] sm:$0xff]
    %v48 = vld [vmem:[%s2] sm:$0xff]
    %v49 = vld [vmem:[%s2 + $0x8] sm:$0xff]
    %v50 = vld [vmem:[%s1] sm:$0xff]
    %v51 = vld [vmem:[%s1 + $0x8] sm:$0xff]
    %v52 = vld [vmem:[%s1 + $0x10] sm:$0xff]
    %v53 = vld [vmem:[%s1 + $0x18] sm:$0xff]
    %v54 = vld [vmem:[%s3] sm:$0xff]
    %v55 = vld [vmem:[%s3 + $0x8] sm:$0xff]
    %vm56 = vcmask 130048
    %v58 = vsel %vm56, %v50, 0
    %v61 = vsel %vm56, %v51, 0
    %v64 = vsel %vm56, %v52, 0
    %v67 = vsel %vm56, %v53, 0
    %69 = vmatprep.subr.mxu0 0.0
    %70 = vmatpush1.msra.mxu0 %v54
    %71 = vmatprep.subr.mxu0 0.0
    %72 = vmatpush1.msra.mxu0 %v55
    %73 = vmatprep.subr.mxu0 0.0
    %74 = vmatpush1.msra.mxu0 0.0
    %75 = vmatprep.subr.mxu0 0.0
    %76 = vmatpush1.msra.mxu0 0.0
    %77 = vmatprep.subr.mxu0 0.0
    %78 = vmatpush1.msra.mxu0 0.0
    %79 = vmatprep.subr.mxu0 0.0
    %80 = vmatpush1.msra.mxu0 0.0
    %81 = vmatprep.subr.mxu0 0.0
    %82 = vmatpush1.msra.mxu0 0.0
    %83 = vmatprep.subr.mxu0 0.0
    %84 = vmatpush1.msra.mxu0 0.0
    %85 = vmatprep.subr.mxu0 0.0
    %86 = vmatpush1.msra.mxu0 0.0
    %87 = vmatprep.subr.mxu0 0.0
    %88 = vmatpush1.msra.mxu0 0.0
    %89 = vmatprep.subr.mxu0 0.0
    %90 = vmatpush1.msra.mxu0 0.0
    %91 = vmatprep.subr.mxu0 0.0
    %92 = vmatpush1.msra.mxu0 0.0
    %93 = vmatprep.subr.mxu0 0.0
    %94 = vmatpush1.msra.mxu0 0.0
    %95 = vmatprep.subr.mxu0 0.0
    %96 = vmatpush1.msra.mxu0 0.0
    %97 = vmatprep.subr.mxu0 0.0
    %98 = vmatpush1.msra.mxu0 0.0
    %99 = vmatprep.subr.mxu0 0.0
    %100 = vmatpush1.msra.mxu0 0.0
    %101 = vmatprep.subr.mxu0 0.0
    %102 = vmatpush1.msra.mxu0 0.0
    %103 = vmatprep.subr.mxu0 0.0
    %104 = vmatpush1.msra.mxu0 0.0
    %105 = vmatprep.subr.mxu0 0.0
    %106 = vmatpush1.msra.mxu0 0.0
    %107 = vmatprep.subr.mxu0 0.0
    %108 = vmatpush1.msra.mxu0 0.0
    %109 = vmatprep.subr.mxu0 0.0
    %110 = vmatpush1.msra.mxu0 0.0
    %111 = vmatprep.subr.mxu0 0.0
    %112 = vmatpush1.msra.mxu0 0.0
    %113 = vmatprep.subr.mxu0 0.0
    %114 = vmatpush1.msra.mxu0 0.0
    %115 = vmatprep.subr.mxu0 0.0
    %116 = vmatpush1.msra.mxu0 0.0
    %117 = vmatprep.subr.mxu0 0.0
    %118 = vmatpush1.msra.mxu0 0.0
    %119 = vmatprep.subr.mxu0 0.0
    %120 = vmatpush1.msra.mxu0 0.0
    %121 = vmatprep.subr.mxu0 0.0
    %122 = vmatpush1.msra.mxu0 0.0
    %123 = vmatprep.subr.mxu0 0.0
    %124 = vmatpush1.msra.mxu0 0.0
    %125 = vmatprep.subr.mxu0 0.0
    %126 = vmatpush1.msra.mxu0 0.0
    %127 = vmatprep.subr.mxu0 0.0
    %128 = vmatpush1.msra.mxu0 0.0
    %129 = vmatprep.subr.mxu0 0.0
    %130 = vmatpush1.msra.mxu0 0.0
    %131 = vmatprep.subr.mxu0 0.0
    %132 = vmatpush1.msra.mxu0 0.0
    %133 = vmatprep.mubr.f32.mxu0 0.0
    %134 = vmatmul.mubr.f32.gmra.mrb[0].mxu0 %v58
    %v135 = vpop.f32.mrb[0].mxu0
    %v136 = vadd.f32 0.0, %v135
    %v137 = vpop.f32.mrb[0].mxu0
    %138 = vmatprep.mubr.f32.mxu0 0.0
    %139 = vmatmul.mubr.f32.gmra.mrb[0].mxu0 %v61
    %v140 = vpop.f32.mrb[0].mxu0
    %v141 = vadd.f32 0.0, %v140
    %v142 = vpop.f32.mrb[0].mxu0
    %143 = vmatprep.mubr.f32.mxu0 0.0
    %144 = vmatmul.mubr.f32.gmra.mrb[0].mxu0 %v64
    %v145 = vpop.f32.mrb[0].mxu0
    %v146 = vadd.f32 0.0, %v145
    %v147 = vpop.f32.mrb[0].mxu0
    %148 = vmatprep.mubr.f32.mxu0 0.0
    %149 = vmatmul.mubr.f32.gmra.mrb[0].mxu0 %v67
    %v150 = vpop.f32.mrb[0].mxu0
    %v151 = vadd.f32 0.0, %v150
    %v152 = vpop.f32.mrb[0].mxu0
    %153 = vdwg.mxu0
    %v155 = vsel %vm56, %v44, 0
    %v158 = vsel %vm56, %v45, 0
    %v161 = vsel %vm56, %v46, 0
    %v164 = vsel %vm56, %v47, 0
    %166 = vmatprep.subr.mxu0 0.0
    %167 = vmatpush1.msra.mxu0 %v48
    %168 = vmatprep.subr.mxu0 0.0
    %169 = vmatpush1.msra.mxu0 %v49
    %170 = vmatprep.subr.mxu0 0.0
    %171 = vmatpush1.msra.mxu0 0.0
    %172 = vmatprep.subr.mxu0 0.0
    %173 = vmatpush1.msra.mxu0 0.0
    %174 = vmatprep.subr.mxu0 0.0
    %175 = vmatpush1.msra.mxu0 0.0
    %176 = vmatprep.subr.mxu0 0.0
    %177 = vmatpush1.msra.mxu0 0.0
    %178 = vmatprep.subr.mxu0 0.0
    %179 = vmatpush1.msra.mxu0 0.0
    %180 = vmatprep.subr.mxu0 0.0
    %181 = vmatpush1.msra.mxu0 0.0
    %182 = vmatprep.subr.mxu0 0.0
    %183 = vmatpush1.msra.mxu0 0.0
    %184 = vmatprep.subr.mxu0 0.0
    %185 = vmatpush1.msra.mxu0 0.0
    %186 = vmatprep.subr.mxu0 0.0
    %187 = vmatpush1.msra.mxu0 0.0
    %188 = vmatprep.subr.mxu0 0.0
    %189 = vmatpush1.msra.mxu0 0.0
    %190 = vmatprep.subr.mxu0 0.0
    %191 = vmatpush1.msra.mxu0 0.0
    %192 = vmatprep.subr.mxu0 0.0
    %193 = vmatpush1.msra.mxu0 0.0
    %194 = vmatprep.subr.mxu0 0.0
    %195 = vmatpush1.msra.mxu0 0.0
    %196 = vmatprep.subr.mxu0 0.0
    %197 = vmatpush1.msra.mxu0 0.0
    %198 = vmatprep.subr.mxu0 0.0
    %199 = vmatpush1.msra.mxu0 0.0
    %200 = vmatprep.subr.mxu0 0.0
    %201 = vmatpush1.msra.mxu0 0.0
    %202 = vmatprep.subr.mxu0 0.0
    %203 = vmatpush1.msra.mxu0 0.0
    %204 = vmatprep.subr.mxu0 0.0
    %205 = vmatpush1.msra.mxu0 0.0
    %206 = vmatprep.subr.mxu0 0.0
    %207 = vmatpush1.msra.mxu0 0.0
    %208 = vmatprep.subr.mxu0 0.0
    %209 = vmatpush1.msra.mxu0 0.0
    %210 = vmatprep.subr.mxu0 0.0
    %211 = vmatpush1.msra.mxu0 0.0
    %212 = vmatprep.subr.mxu0 0.0
    %213 = vmatpush1.msra.mxu0 0.0
    %214 = vmatprep.subr.mxu0 0.0
    %215 = vmatpush1.msra.mxu0 0.0
    %216 = vmatprep.subr.mxu0 0.0
    %217 = vmatpush1.msra.mxu0 0.0
    %218 = vmatprep.subr.mxu0 0.0
    %219 = vmatpush1.msra.mxu0 0.0
    %220 = vmatprep.subr.mxu0 0.0
    %221 = vmatpush1.msra.mxu0 0.0
    %222 = vmatprep.subr.mxu0 0.0
    %223 = vmatpush1.msra.mxu0 0.0
    %224 = vmatprep.subr.mxu0 0.0
    %225 = vmatpush1.msra.mxu0 0.0
    %226 = vmatprep.subr.mxu0 0.0
    %227 = vmatpush1.msra.mxu0 0.0
    %228 = vmatprep.subr.mxu0 0.0
    %229 = vmatpush1.msra.mxu0 0.0
    %230 = vmatprep.mubr.f32.mxu0 0.0
    %231 = vmatmul.mubr.f32.gmra.mrb[0].mxu0 %v155
    %v232 = vpop.f32.mrb[0].mxu0
    %v233 = vadd.f32 %v136, %v232
    %v234 = vpop.f32.mrb[0].mxu0
    %235 = vmatprep.mubr.f32.mxu0 0.0
    %236 = vmatmul.mubr.f32.gmra.mrb[0].mxu0 %v158
    %v237 = vpop.f32.mrb[0].mxu0
    %v238 = vadd.f32 %v141, %v237
    %v239 = vpop.f32.mrb[0].mxu0
    %240 = vmatprep.mubr.f32.mxu0 0.0
    %241 = vmatmul.mubr.f32.gmra.mrb[0].mxu0 %v161
    %v242 = vpop.f32.mrb[0].mxu0
    %v243 = vadd.f32 %v146, %v242
    %v244 = vpop.f32.mrb[0].mxu0
    %245 = vmatprep.mubr.f32.mxu0 0.0
    %246 = vmatmul.mubr.f32.gmra.mrb[0].mxu0 %v164
    %v247 = vpop.f32.mrb[0].mxu0
    %v248 = vadd.f32 %v151, %v247
    %v249 = vpop.f32.mrb[0].mxu0
    %250 = vdwg.mxu0
    %v251 = vld [vmem:[%s4] sm:$0x1]
    %v253 = vlaneseq
    %v254 = vshrl.u32 %v253, 7
    %v255 = vsub.s32 0, %v254
    %v256 = vrot.slane %v251, %v255
    %v258 = vadd.f32 %v233, %v256
    %v259 = vadd.f32 %v238, %v256
    %v260 = vadd.f32 %v243, %v256
    %v261 = vadd.f32 %v248, %v256
    %v262 = vmax.f32 %v258, 0.0
    %v263 = vmax.f32 %v259, 0.0
    %v264 = vmax.f32 %v260, 0.0
    %v265 = vmax.f32 %v261, 0.0
    %v266 = vld [vmem:[%s5] sm:$0xff]
    %v267 = vld [vmem:[%s5 + $0x8] sm:$0xff]
    %v268 = vld [vmem:[%s5 + $0x10] sm:$0xff]
    %v269 = vld [vmem:[%s5 + $0x18] sm:$0xff]
    %v270 = vld [vmem:[%s6] sm:$0x1]
    %v272 = vlaneseq
    %v273 = vshrl.u32 %v272, 7
    %v274 = vsub.s32 0, %v273
    %v275 = vrot.slane %v270, %v274
    %vm277 = vcmask 261120
    %v279 = vsel %vm277, %v262, 0
    %v282 = vsel %vm277, %v263, 0
    %v285 = vsel %vm277, %v264, 0
    %v288 = vsel %vm277, %v265, 0
    %290 = vmatprep.subr.mxu0 0.0
    %291 = vmatpush1.msra.mxu0 %v266
    %292 = vmatprep.subr.mxu0 0.0
    %293 = vmatpush1.msra.mxu0 %v267
    %294 = vmatprep.subr.mxu0 0.0
    %295 = vmatpush1.msra.mxu0 %v268
    %296 = vmatprep.subr.mxu0 0.0
    %297 = vmatpush1.msra.mxu0 %v269
    %298 = vmatprep.subr.mxu0 0.0
    %299 = vmatpush1.msra.mxu0 0.0
    %300 = vmatprep.subr.mxu0 0.0
    %301 = vmatpush1.msra.mxu0 0.0
    %302 = vmatprep.subr.mxu0 0.0
    %303 = vmatpush1.msra.mxu0 0.0
    %304 = vmatprep.subr.mxu0 0.0
    %305 = vmatpush1.msra.mxu0 0.0
    %306 = vmatprep.subr.mxu0 0.0
    %307 = vmatpush1.msra.mxu0 0.0
    %308 = vmatprep.subr.mxu0 0.0
    %309 = vmatpush1.msra.mxu0 0.0
    %310 = vmatprep.subr.mxu0 0.0
    %311 = vmatpush1.msra.mxu0 0.0
    %312 = vmatprep.subr.mxu0 0.0
    %313 = vmatpush1.msra.mxu0 0.0
    %314 = vmatprep.subr.mxu0 0.0
    %315 = vmatpush1.msra.mxu0 0.0
    %316 = vmatprep.subr.mxu0 0.0
    %317 = vmatpush1.msra.mxu0 0.0
    %318 = vmatprep.subr.mxu0 0.0
    %319 = vmatpush1.msra.mxu0 0.0
    %320 = vmatprep.subr.mxu0 0.0
    %321 = vmatpush1.msra.mxu0 0.0
    %322 = vmatprep.subr.mxu0 0.0
    %323 = vmatpush1.msra.mxu0 0.0
    %324 = vmatprep.subr.mxu0 0.0
    %325 = vmatpush1.msra.mxu0 0.0
    %326 = vmatprep.subr.mxu0 0.0
    %327 = vmatpush1.msra.mxu0 0.0
    %328 = vmatprep.subr.mxu0 0.0
    %329 = vmatpush1.msra.mxu0 0.0
    %330 = vmatprep.subr.mxu0 0.0
    %331 = vmatpush1.msra.mxu0 0.0
    %332 = vmatprep.subr.mxu0 0.0
    %333 = vmatpush1.msra.mxu0 0.0
    %334 = vmatprep.subr.mxu0 0.0
    %335 = vmatpush1.msra.mxu0 0.0
    %336 = vmatprep.subr.mxu0 0.0
    %337 = vmatpush1.msra.mxu0 0.0
    %338 = vmatprep.subr.mxu0 0.0
    %339 = vmatpush1.msra.mxu0 0.0
    %340 = vmatprep.subr.mxu0 0.0
    %341 = vmatpush1.msra.mxu0 0.0
    %342 = vmatprep.subr.mxu0 0.0
    %343 = vmatpush1.msra.mxu0 0.0
    %344 = vmatprep.subr.mxu0 0.0
    %345 = vmatpush1.msra.mxu0 0.0
    %346 = vmatprep.subr.mxu0 0.0
    %347 = vmatpush1.msra.mxu0 0.0
    %348 = vmatprep.subr.mxu0 0.0
    %349 = vmatpush1.msra.mxu0 0.0
    %350 = vmatprep.subr.mxu0 0.0
    %351 = vmatpush1.msra.mxu0 0.0
    %352 = vmatprep.subr.mxu0 0.0
    %353 = vmatpush1.msra.mxu0 0.0
    %354 = vmatprep.mubr.f32.mxu0 0.0
    %355 = vmatmul.mubr.f32.gmra.mrb[0].mxu0 %v279
    %v356 = vpop.f32.mrb[0].mxu0
    %v357 = vadd.f32 %v275, %v356
    %v358 = vpop.f32.mrb[0].mxu0
    %359 = vmatprep.mubr.f32.mxu0 0.0
    %360 = vmatmul.mubr.f32.gmra.mrb[0].mxu0 %v282
    %v361 = vpop.f32.mrb[0].mxu0
    %v362 = vadd.f32 %v275, %v361
    %v363 = vpop.f32.mrb[0].mxu0
    %364 = vmatprep.mubr.f32.mxu0 0.0
    %365 = vmatmul.mubr.f32.gmra.mrb[0].mxu0 %v285
    %v366 = vpop.f32.mrb[0].mxu0
    %v367 = vadd.f32 %v275, %v366
    %v368 = vpop.f32.mrb[0].mxu0
    %369 = vmatprep.mubr.f32.mxu0 0.0
    %370 = vmatmul.mubr.f32.gmra.mrb[0].mxu0 %v288
    %v371 = vpop.f32.mrb[0].mxu0
    %v372 = vadd.f32 %v275, %v371
    %v373 = vpop.f32.mrb[0].mxu0
    %374 = vdwg.mxu0
    %v375 = vmax.f32 %v357, 0.0
    %v376 = vmax.f32 %v362, 0.0
    %v377 = vmax.f32 %v367, 0.0
    %v378 = vmax.f32 %v372, 0.0
    %v379 = vld [vmem:[%s7] sm:$0xff]
    %v380 = vld [vmem:[%s7 + $0x8] sm:$0xff]
    %v381 = vld [vmem:[%s7 + $0x10] sm:$0xff]
    %v382 = vld [vmem:[%s7 + $0x18] sm:$0xff]
    %v383 = vld [vmem:[#allocation2] sm:$0x1]
    %v385 = vlaneseq
    %v386 = vshrl.u32 %v385, 7
    %v387 = vsub.s32 0, %v386
    %v388 = vrot.slane %v383, %v387
    %v391 = vsel %vm277, %v375, 0
    %v394 = vsel %vm277, %v376, 0
    %v397 = vsel %vm277, %v377, 0
    %v400 = vsel %vm277, %v378, 0
    %402 = vmatprep.subr.mxu0 0.0
    %403 = vmatpush1.msra.mxu0 %v379
    %404 = vmatprep.subr.mxu0 0.0
    %405 = vmatpush1.msra.mxu0 %v380
    %406 = vmatprep.subr.mxu0 0.0
    %407 = vmatpush1.msra.mxu0 %v381
    %408 = vmatprep.subr.mxu0 0.0
    %409 = vmatpush1.msra.mxu0 %v382
    %410 = vmatprep.subr.mxu0 0.0
    %411 = vmatpush1.msra.mxu0 0.0
    %412 = vmatprep.subr.mxu0 0.0
    %413 = vmatpush1.msra.mxu0 0.0
    %414 = vmatprep.subr.mxu0 0.0
    %415 = vmatpush1.msra.mxu0 0.0
    %416 = vmatprep.subr.mxu0 0.0
    %417 = vmatpush1.msra.mxu0 0.0
    %418 = vmatprep.subr.mxu0 0.0
    %419 = vmatpush1.msra.mxu0 0.0
    %420 = vmatprep.subr.mxu0 0.0
    %421 = vmatpush1.msra.mxu0 0.0
    %422 = vmatprep.subr.mxu0 0.0
    %423 = vmatpush1.msra.mxu0 0.0
    %424 = vmatprep.subr.mxu0 0.0
    %425 = vmatpush1.msra.mxu0 0.0
    %426 = vmatprep.subr.mxu0 0.0
    %427 = vmatpush1.msra.mxu0 0.0
    %428 = vmatprep.subr.mxu0 0.0
    %429 = vmatpush1.msra.mxu0 0.0
    %430 = vmatprep.subr.mxu0 0.0
    %431 = vmatpush1.msra.mxu0 0.0
    %432 = vmatprep.subr.mxu0 0.0
    %433 = vmatpush1.msra.mxu0 0.0
    %434 = vmatprep.subr.mxu0 0.0
    %435 = vmatpush1.msra.mxu0 0.0
    %436 = vmatprep.subr.mxu0 0.0
    %437 = vmatpush1.msra.mxu0 0.0
    %438 = vmatprep.subr.mxu0 0.0
    %439 = vmatpush1.msra.mxu0 0.0
    %440 = vmatprep.subr.mxu0 0.0
    %441 = vmatpush1.msra.mxu0 0.0
    %442 = vmatprep.subr.mxu0 0.0
    %443 = vmatpush1.msra.mxu0 0.0
    %444 = vmatprep.subr.mxu0 0.0
    %445 = vmatpush1.msra.mxu0 0.0
    %446 = vmatprep.subr.mxu0 0.0
    %447 = vmatpush1.msra.mxu0 0.0
    %448 = vmatprep.subr.mxu0 0.0
    %449 = vmatpush1.msra.mxu0 0.0
    %450 = vmatprep.subr.mxu0 0.0
    %451 = vmatpush1.msra.mxu0 0.0
    %452 = vmatprep.subr.mxu0 0.0
    %453 = vmatpush1.msra.mxu0 0.0
    %454 = vmatprep.subr.mxu0 0.0
    %455 = vmatpush1.msra.mxu0 0.0
    %456 = vmatprep.subr.mxu0 0.0
    %457 = vmatpush1.msra.mxu0 0.0
    %458 = vmatprep.subr.mxu0 0.0
    %459 = vmatpush1.msra.mxu0 0.0
    %460 = vmatprep.subr.mxu0 0.0
    %461 = vmatpush1.msra.mxu0 0.0
    %462 = vmatprep.subr.mxu0 0.0
    %463 = vmatpush1.msra.mxu0 0.0
    %464 = vmatprep.subr.mxu0 0.0
    %465 = vmatpush1.msra.mxu0 0.0
    %466 = vmatprep.mubr.f32.mxu0 0.0
    %467 = vmatmul.mubr.f32.gmra.mrb[0].mxu0 %v391
    %v468 = vpop.f32.mrb[0].mxu0
    %v469 = vadd.f32 %v388, %v468
    %v470 = vpop.f32.mrb[0].mxu0
    %471 = vmatprep.mubr.f32.mxu0 0.0
    %472 = vmatmul.mubr.f32.gmra.mrb[0].mxu0 %v394
    %v473 = vpop.f32.mrb[0].mxu0
    %v474 = vadd.f32 %v388, %v473
    %v475 = vpop.f32.mrb[0].mxu0
    %476 = vmatprep.mubr.f32.mxu0 0.0
    %477 = vmatmul.mubr.f32.gmra.mrb[0].mxu0 %v397
    %v478 = vpop.f32.mrb[0].mxu0
    %v479 = vadd.f32 %v388, %v478
    %v480 = vpop.f32.mrb[0].mxu0
    %481 = vmatprep.mubr.f32.mxu0 0.0
    %482 = vmatmul.mubr.f32.gmra.mrb[0].mxu0 %v400
    %v483 = vpop.f32.mrb[0].mxu0
    %v484 = vadd.f32 %v388, %v483
    %v485 = vpop.f32.mrb[0].mxu0
    %486 = vdwg.mxu0
    %487 = vst [vmem:[%s9] sm:$0xff] %v469
    %488 = vst [vmem:[%s9 + $0x8] sm:$0xff] %v474
    %489 = vst [vmem:[%s9 + $0x10] sm:$0xff] %v479
    %490 = vst [vmem:[%s9 + $0x18] sm:$0xff] %v484
    // Predicated region
    $region42: #{_forward.1} parent=1 // pred_check
      _
    $region43: #{_forward.1} parent=1 // pred_check_branch
      %492 = sbr.rel (0) target = $region45
    $region44: #{_forward.1} parent=1 // pred_region
      _
    $region45: #{_forward.1} parent=1 // pred_fallthru
      _
    // Predicated region
    $region46: #{_forward.1} parent=1 // pred_check
      _
    $region47: #{_forward.1} parent=1 // pred_check_branch
      %494 = sbr.rel (0) target = $region49
    $region48: #{_forward.1} parent=1 // pred_region
      _
    $region49: #{_forward.1} parent=1 // pred_fallthru
      _
    %495 = vsyncpa [#allocation3], 1

</llo_original>
